<compile_context>
chip_gen: v6e
topology: v6e:2x2x1
jax: 0.10.0
libtpu: 0.0.40
codegen_flags: <defaults>
</compile_context>

<pallas_src>
import math

import jax
import jax.numpy as jnp
from jax import lax
from jax.experimental import pallas as pl
from jax.experimental.pallas import tpu as pltpu


# ---------------------------------------------------------------------------
# Tiling helpers
# ---------------------------------------------------------------------------
def _round_up(x, m):
    return ((x + m - 1) // m) * m


def _pick_tile(dim, align, cap):
    # Smallest aligned tile covering `dim`, capped.  Cap must be a multiple of
    # align so the (8, 128) divisibility contract holds.
    assert cap % align == 0, f"tile cap {cap} must be a multiple of {align}"
    return min(_round_up(dim, align), cap)


def _pad2d(a, rows, cols):
    pr, pc = rows - a.shape[0], cols - a.shape[1]
    if pr or pc:
        a = jnp.pad(a, ((0, pr), (0, pc)))
    return a


def _pad_row(v, cols):
    # 1-D [n] -> [1, cols] lane-major row.
    out = v.reshape(1, -1)
    pc = cols - out.shape[1]
    if pc:
        out = jnp.pad(out, ((0, 0), (0, pc)))
    return out


# ---------------------------------------------------------------------------
# Pallas kernels (output block (i, j) is k-invariant -> accumulate into o_ref)
# ---------------------------------------------------------------------------
def _noisy_linear_train_kernel(x_ref, wmu_ref, wsig_ref, eps_in_ref,
                               eps_out_ref, beff_ref, o_ref):
    k = pl.program_id(2)

    @pl.when(k == 0)
    def _():
        # Seed the resident output tile with the effective bias.
        o_ref[...] = jnp.broadcast_to(beff_ref[...], o_ref.shape)

    cdt = wmu_ref.dtype                       # MXU feed dtype (bf16 or f32)
    x = x_ref[...]                            # [tm, tk] f32
    x_noisy = x * eps_in_ref[...]             # f32 elementwise (v5e-safe)

    # Weights stored [in, out]: plain A @ B is the native MXU orientation.
    part_mu = jnp.dot(x.astype(cdt), wmu_ref[...],
                      preferred_element_type=jnp.float32)
    part_sig = jnp.dot(x_noisy.astype(cdt), wsig_ref[...],
                       preferred_element_type=jnp.float32)
    # eps_out is constant across k for a given out-tile -> per-step scaling of
    # the partial sum is exact.
    o_ref[...] += part_mu + part_sig * eps_out_ref[...]


def _noisy_linear_eval_kernel(x_ref, wmu_ref, bmu_ref, o_ref):
    k = pl.program_id(2)

    @pl.when(k == 0)
    def _():
        o_ref[...] = jnp.broadcast_to(bmu_ref[...], o_ref.shape)

    o_ref[...] += jnp.dot(x_ref[...].astype(wmu_ref.dtype), wmu_ref[...],
                          preferred_element_type=jnp.float32)


# ---------------------------------------------------------------------------
# One-time preparation (at init / reset_noise time, NOT per forward)
# ---------------------------------------------------------------------------
def prepare_noisy_linear(params, compute_dtype=jnp.bfloat16,
                         tk_cap=512, tn_cap=512, split_out_for_megacore=True):
    """Pre-pad, pre-transpose ([in, out]) and pre-cast the weights, and
    precompute the bias rows.  Call this once after init / reset_noise."""
    wmu = params["weight_mu"]
    out_f, in_f = wmu.shape

    tk = _pick_tile(in_f, 128, tk_cap)
    tn = _pick_tile(out_f, 128, tn_cap)
    pi = _round_up(in_f, tk)
    po = _round_up(out_f, tn)

    # v7x megacore: guarantee >= 2 output tiles on the "parallel" j axis when
    # the padded out dim can be split into 128-multiples.  Harmless on v5e/v6e.
    if split_out_for_megacore and po // tn == 1 and tn % 256 == 0:
        tn //= 2

    wmu_t = _pad2d(wmu.T, pi, po).astype(compute_dtype)
    wsig_t = _pad2d(params["weight_sigma"].T, pi, po).astype(compute_dtype)
    eps_in_row = _pad_row(params["eps_in"], pi)
    eps_out_row = _pad_row(params["eps_out"], po)
    bias_mu_row = _pad_row(params["bias_mu"], po)
    bias_eff_row = _pad_row(
        params["bias_mu"] + params["bias_sigma"] * params["bias_epsilon"], po)

    return {
        "in_features": in_f, "out_features": out_f,
        "pi": pi, "po": po, "tk": tk, "tn": tn,
        "weight_mu_t": wmu_t, "weight_sigma_t": wsig_t,     # [pi, po] compute_dtype
        "eps_in_row": eps_in_row,                            # [1, pi] f32
        "eps_out_row": eps_out_row,                          # [1, po] f32
        "bias_mu_row": bias_mu_row,                          # [1, po] f32
        "bias_eff_row": bias_eff_row,                        # [1, po] f32
    }


# ---------------------------------------------------------------------------
# Forward (hot path: only x is padded per call)
# ---------------------------------------------------------------------------
def noisy_linear_forward(x, prepared, training=True, tm_cap=1024):
    """x: [B, in_features] f32; prepared: dict from prepare_noisy_linear."""
    B, in_f = x.shape
    assert in_f == prepared["in_features"]
    out_f = prepared["out_features"]
    pi, po = prepared["pi"], prepared["po"]
    tk, tn = prepared["tk"], prepared["tn"]

    # Batch tile aligned to f32 sublanes (8); large tm_cap so typical batches
    # fit in one i-tile and the weight streams are read from HBM exactly once.
    tm = _pick_tile(B, 8, tm_cap)
    pb = _round_up(B, tm)
    grid = (pb // tm, po // tn, pi // tk)

    xp = _pad2d(x.astype(jnp.float32), pb, pi)

    x_spec = pl.BlockSpec((tm, tk), lambda i, j, k: (i, k))
    w_spec = pl.BlockSpec((tk, tn), lambda i, j, k: (k, j))
    row_in_spec = pl.BlockSpec((1, tk), lambda i, j, k: (0, k))
    row_out_spec = pl.BlockSpec((1, tn), lambda i, j, k: (0, j))
    out_spec = pl.BlockSpec((tm, tn), lambda i, j, k: (i, j))

    out_shape = jax.ShapeDtypeStruct((pb, po), jnp.float32)
    cparams = pltpu.CompilerParams(
        dimension_semantics=("parallel", "parallel", "arbitrary"),
        vmem_limit_bytes=32 * 1024 * 1024)   # raise v5e's 16 MiB scoped default

    if training:
        y = pl.pallas_call(
            _noisy_linear_train_kernel,
            out_shape=out_shape,
            grid_spec=pltpu.PrefetchScalarGridSpec(
                num_scalar_prefetch=0,
                grid=grid,
                in_specs=[x_spec, w_spec, w_spec, row_in_spec, row_out_spec,
                          row_out_spec],
                out_specs=out_spec),
            compiler_params=cparams,
        )(xp, prepared["weight_mu_t"], prepared["weight_sigma_t"],
          prepared["eps_in_row"], prepared["eps_out_row"],
          prepared["bias_eff_row"])
    else:
        y = pl.pallas_call(
            _noisy_linear_eval_kernel,
            out_shape=out_shape,
            grid_spec=pltpu.PrefetchScalarGridSpec(
                num_scalar_prefetch=0,
                grid=grid,
                in_specs=[x_spec, w_spec, row_out_spec],
                out_specs=out_spec),
            compiler_params=cparams,
        )(xp, prepared["weight_mu_t"], prepared["bias_mu_row"])

    return y[:B, :out_f]


# ---------------------------------------------------------------------------
# Deterministic parameter + noise initialization (mirrors the PyTorch module)
# ---------------------------------------------------------------------------
def _scale_noise(key, size):
    # x.sign() * sqrt(|x|) with x ~ N(0, 1)
    x = jax.random.normal(key, (size,), dtype=jnp.float32)
    return jnp.sign(x) * jnp.sqrt(jnp.abs(x))


def init_noisy_linear(key, in_features, out_features, std_init=0.4):
    k_wmu, k_bmu, k_ein, k_eout = jax.random.split(key, 4)
    mu_range = 1.0 / math.sqrt(in_features)
    sigma_val = std_init / math.sqrt(in_features)

    weight_mu = jax.random.uniform(
        k_wmu, (out_features, in_features), jnp.float32, -mu_range, mu_range)
    bias_mu = jax.random.uniform(
        k_bmu, (out_features,), jnp.float32, -mu_range, mu_range)
    weight_sigma = jnp.full((out_features, in_features), sigma_val, jnp.float32)
    bias_sigma = jnp.full((out_features,), sigma_val, jnp.float32)

    eps_in = _scale_noise(k_ein, in_features)      # [in]
    eps_out = _scale_noise(k_eout, out_features)   # [out]

    # Note: the materialized rank-1 weight_epsilon is intentionally NOT stored;
    # the kernel uses the exact factors eps_in / eps_out.
    return {
        "weight_mu": weight_mu,
        "weight_sigma": weight_sigma,
        "bias_mu": bias_mu,
        "bias_sigma": bias_sigma,
        "bias_epsilon": eps_out,
        "eps_in": eps_in,
        "eps_out": eps_out,
    }


# ---------------------------------------------------------------------------
# Reference (plain JAX, materializes weight_epsilon exactly like PyTorch)
# ---------------------------------------------------------------------------
def noisy_linear_reference(x, params, training=True):
    if training:
        w_eps = jnp.outer(params["eps_out"], params["eps_in"])
        w = params["weight_mu"] + params["weight_sigma"] * w_eps
        b = params["bias_mu"] + params["bias_sigma"] * params["bias_epsilon"]
    else:
        w = params["weight_mu"]
        b = params["bias_mu"]
    return jnp.dot(x, w.T, precision=lax.Precision.HIGHEST) + b


# ---------------------------------------------------------------------------
if __name__ == "__main__":
    key = jax.random.PRNGKey(0)
    k_params, k_x, k_params2, k_x2 = jax.random.split(key, 4)

    # Small shape consistent with the module's use as an RL head layer.
    B, in_features, out_features = 8, 32, 64
    params = init_noisy_linear(k_params, in_features, out_features, std_init=0.4)
    x = jax.random.normal(k_x, (B, in_features), dtype=jnp.float32)

    ref_train = noisy_linear_reference(x, params, training=True)
    ref_eval = noisy_linear_reference(x, params, training=False)

    # f32 MXU feed: tight correctness check of the kernel structure.
    prep_f32 = prepare_noisy_linear(params, compute_dtype=jnp.float32)
    y_tr_f32 = jax.block_until_ready(
        noisy_linear_forward(x, prep_f32, training=True))
    y_ev_f32 = jax.block_until_ready(
        noisy_linear_forward(x, prep_f32, training=False))
    assert y_tr_f32.shape == (B, out_features)
    assert y_ev_f32.shape == (B, out_features)
    assert jnp.allclose(y_tr_f32, ref_train, atol=1e-3, rtol=1e-3)
    assert jnp.allclose(y_ev_f32, ref_eval, atol=1e-3, rtol=1e-3)

    # Default bf16 MXU feed (halves weight HBM traffic): looser tolerance.
    # TODO(synk): bf16 feed downcasts activations too — keep f32 prepare if
    # full activation precision is required.
    prep_bf16 = prepare_noisy_linear(params, compute_dtype=jnp.bfloat16)
    y_tr_bf16 = jax.block_until_ready(
        noisy_linear_forward(x, prep_bf16, training=True))
    y_ev_bf16 = jax.block_until_ready(
        noisy_linear_forward(x, prep_bf16, training=False))
    assert jnp.allclose(y_tr_bf16, ref_train, atol=3e-2, rtol=3e-2)
    assert jnp.allclose(y_ev_bf16, ref_eval, atol=3e-2, rtol=3e-2)

    # Multi-tile shape exercising k-axis accumulation (grid k > 1) and the
    # megacore out-tile split (out=512 -> tn=256, 2 parallel j tiles).
    B2, in2, out2 = 16, 1024, 512
    params2 = init_noisy_linear(k_params2, in2, out2, std_init=0.4)
    x2 = jax.random.normal(k_x2, (B2, in2), dtype=jnp.float32)
    prep2 = prepare_noisy_linear(params2, compute_dtype=jnp.float32)
    y2 = jax.block_until_ready(noisy_linear_forward(x2, prep2, training=True))
    ref2 = noisy_linear_reference(x2, params2, training=True)
    assert y2.shape == (B2, out2)
    assert jnp.allclose(y2, ref2, atol=1e-3, rtol=1e-3)

    print("KERNEL_OK")
</pallas_src>

<mosaic_0001>
module attributes {stable_mosaic.version = 11 : i64} {
  func.func @_noisy_linear_train_kernel(%arg0: i32, %arg1: i32, %arg2: i32, %arg3: memref<8x128xf32, #tpu.memory_space<vmem>>, %arg4: memref<128x128xf32, #tpu.memory_space<vmem>>, %arg5: memref<128x128xf32, #tpu.memory_space<vmem>>, %arg6: memref<1x128xf32, #tpu.memory_space<vmem>>, %arg7: memref<1x128xf32, #tpu.memory_space<vmem>>, %arg8: memref<1x128xf32, #tpu.memory_space<vmem>>, %arg9: memref<8x128xf32, #tpu.memory_space<vmem>>) attributes {dimension_semantics = [#tpu.dimension_semantics<parallel>, #tpu.dimension_semantics<parallel>, #tpu.dimension_semantics<arbitrary>], iteration_bounds = array<i64: 1, 1, 1>, scalar_prefetch = 0 : i64, scratch_operands = 0 : i64, tpu.core_type = #tpu.core_type<tc>, window_params = [{transform_indices = @transform_0, window_bounds = array<i64: 8, 128>}, {transform_indices = @transform_1, window_bounds = array<i64: 128, 128>}, {transform_indices = @transform_2, window_bounds = array<i64: 128, 128>}, {transform_indices = @transform_3, window_bounds = array<i64: 1, 128>}, {transform_indices = @transform_4, window_bounds = array<i64: 1, 128>}, {transform_indices = @transform_5, window_bounds = array<i64: 1, 128>}, {transform_indices = @transform_6, window_bounds = array<i64: 8, 128>}]} {
    %c0_i32 = arith.constant 0 : i32
    %0 = arith.cmpi eq, %arg2, %c0_i32 : i32
    %1 = arith.extui %0 : i1 to i32
    %c0_i32_0 = arith.constant 0 : i32
    %2 = arith.cmpi ne, %1, %c0_i32_0 : i32
    scf.if %2 {
      %c0_15 = arith.constant 0 : index
      %c0_16 = arith.constant 0 : index
      %18 = vector.load %arg8[%c0_15, %c0_16] : memref<1x128xf32, #tpu.memory_space<vmem>>, vector<1x128xf32>
      %19 = vector.shape_cast %18 : vector<1x128xf32> to vector<1x128xf32>
      %20 = vector.broadcast %19 : vector<1x128xf32> to vector<8x128xf32>
      %c0_17 = arith.constant 0 : index
      %c0_18 = arith.constant 0 : index
      %21 = vector.load %arg9[%c0_17, %c0_18] : memref<8x128xf32, #tpu.memory_space<vmem>>, vector<8x128xf32>
      tpu.vector_store %arg9[%c0_17, %c0_18], %20 {strides = array<i32>} : memref<8x128xf32, #tpu.memory_space<vmem>>, vector<8x128xf32>,
    } else {
    }
    %c0 = arith.constant 0 : index
    %c0_1 = arith.constant 0 : index
    %3 = vector.load %arg3[%c0, %c0_1] : memref<8x128xf32, #tpu.memory_space<vmem>>, vector<8x128xf32>
    %c0_2 = arith.constant 0 : index
    %c0_3 = arith.constant 0 : index
    %4 = vector.load %arg6[%c0_2, %c0_3] : memref<1x128xf32, #tpu.memory_space<vmem>>, vector<1x128xf32>
    %5 = vector.broadcast %4 : vector<1x128xf32> to vector<8x128xf32>
    %6 = arith.mulf %3, %5 : vector<8x128xf32>
    %c0_4 = arith.constant 0 : index
    %c0_5 = arith.constant 0 : index
    %7 = vector.load %arg4[%c0_4, %c0_5] : memref<128x128xf32, #tpu.memory_space<vmem>>, vector<128x128xf32>
    %cst = arith.constant dense<0.000000e+00> : vector<8x128xf32>
    %8 = tpu.matmul %3, %7, %cst {dimension_numbers = #tpu.dot_dimension_numbers<[1], [0], [0], [1], [0, 0, 1, 1], [], []>} : vector<8x128xf32>, vector<128x128xf32>, vector<8x128xf32> -> vector<8x128xf32>
    %c0_6 = arith.constant 0 : index
    %c0_7 = arith.constant 0 : index
    %9 = vector.load %arg5[%c0_6, %c0_7] : memref<128x128xf32, #tpu.memory_space<vmem>>, vector<128x128xf32>
    %cst_8 = arith.constant dense<0.000000e+00> : vector<8x128xf32>
    %10 = tpu.matmul %6, %9, %cst_8 {dimension_numbers = #tpu.dot_dimension_numbers<[1], [0], [0], [1], [0, 0, 1, 1], [], []>} : vector<8x128xf32>, vector<128x128xf32>, vector<8x128xf32> -> vector<8x128xf32>
    %c0_9 = arith.constant 0 : index
    %c0_10 = arith.constant 0 : index
    %11 = vector.load %arg9[%c0_9, %c0_10] : memref<8x128xf32, #tpu.memory_space<vmem>>, vector<8x128xf32>
    %c0_11 = arith.constant 0 : index
    %c0_12 = arith.constant 0 : index
    %12 = vector.load %arg7[%c0_11, %c0_12] : memref<1x128xf32, #tpu.memory_space<vmem>>, vector<1x128xf32>
    %13 = vector.broadcast %12 : vector<1x128xf32> to vector<8x128xf32>
    %14 = arith.mulf %10, %13 : vector<8x128xf32>
    %15 = arith.addf %8, %14 : vector<8x128xf32>
    %16 = arith.addf %11, %15 : vector<8x128xf32>
    %c0_13 = arith.constant 0 : index
    %c0_14 = arith.constant 0 : index
    %17 = vector.load %arg9[%c0_13, %c0_14] : memref<8x128xf32, #tpu.memory_space<vmem>>, vector<8x128xf32>
    tpu.vector_store %arg9[%c0_13, %c0_14], %16 {strides = array<i32>} : memref<8x128xf32, #tpu.memory_space<vmem>>, vector<8x128xf32>,
    return
  }
  func.func @transform_0(%arg0: i32, %arg1: i32, %arg2: i32) -> (i32, i32) {
    %c0_i32 = arith.constant 0 : i32
    return %arg0, %arg2 : i32, i32
  }
  func.func @transform_1(%arg0: i32, %arg1: i32, %arg2: i32) -> (i32, i32) {
    %c0_i32 = arith.constant 0 : i32
    return %arg2, %arg1 : i32, i32
  }
  func.func @transform_2(%arg0: i32, %arg1: i32, %arg2: i32) -> (i32, i32) {
    %c0_i32 = arith.constant 0 : i32
    return %arg2, %arg1 : i32, i32
  }
  func.func @transform_3(%arg0: i32, %arg1: i32, %arg2: i32) -> (i32, i32) {
    %c0_i32 = arith.constant 0 : i32
    %c0_i32_0 = arith.constant 0 : i32
    return %c0_i32, %arg2 : i32, i32
  }
  func.func @transform_4(%arg0: i32, %arg1: i32, %arg2: i32) -> (i32, i32) {
    %c0_i32 = arith.constant 0 : i32
    %c0_i32_0 = arith.constant 0 : i32
    return %c0_i32, %arg1 : i32, i32
  }
  func.func @transform_5(%arg0: i32, %arg1: i32, %arg2: i32) -> (i32, i32) {
    %c0_i32 = arith.constant 0 : i32
    %c0_i32_0 = arith.constant 0 : i32
    return %c0_i32, %arg1 : i32, i32
  }
  func.func @transform_6(%arg0: i32, %arg1: i32, %arg2: i32) -> (i32, i32) {
    %c0_i32 = arith.constant 0 : i32
    return %arg0, %arg1 : i32, i32
  }
}

</mosaic_0001>

<llo_original>
// kernel: tpu_custom_call.1
$region0: #{tpu_custom_call.1}
  #allocation0 [shape = 'u32[]', space=smem, size = 0x4, offset = 0x4, fixed_abs, tag = 'smem constant byte address 0x4 - core index']
  #allocation1 [shape = 'u32[144,128]{1,0:T(1,128)}', space=vmem, size = 0x12000, scoped, tag = 'internal scratch']
  %s0 = inlined_call_operand.hbm [shape: f32[8,128], index: 0, kind: input, shape index: {}]
  %s1 = inlined_call_operand.hbm [shape: f32[128,128], index: 1, kind: input, shape index: {}]
  %s2 = inlined_call_operand.hbm [shape: f32[128,128], index: 2, kind: input, shape index: {}]
  %s3 = inlined_call_operand.vmem [shape: f32[1,128], index: 3, kind: input, shape index: {}]
  %s4 = inlined_call_operand.vmem [shape: f32[1,128], index: 4, kind: input, shape index: {}]
  %s5 = inlined_call_operand.vmem [shape: f32[1,128], index: 5, kind: input, shape index: {}]
  %s6 = inlined_call_operand.hbm [shape: f32[8,128], index: 6, kind: output, shape index: {}]
  %s7 = sld [smem:[#allocation0]]
  $region50: #{tpu_custom_call.1} parent=0
    _
  %s9 = ssub.s32 1, %s7
  %s10 = scalar_select 0, %s9, %s7
  $region1: #{tpu_custom_call.1} parent=0
    #allocation2 [shape = 'u8[4096]{0}', space=vmem, size = 0x1000, scoped, tag = 'input window, operand 0, single buffered']
    #allocation3 [shape = 's32[1]{0}', space=sflag, size = 0x4, scoped, tag = 'scoped memory for tpu_custom_call.1']
    #allocation4 [shape = 's32[1]{0}', space=sflag, size = 0x4, scoped, tag = 'scoped memory for tpu_custom_call.1']
    #allocation5 [shape = 'u8[65536]{0}', space=vmem, size = 0x10000, scoped, tag = 'input window, operand 1, single buffered']
    #allocation6 [shape = 's32[1]{0}', space=sflag, size = 0x4, scoped, tag = 'scoped memory for tpu_custom_call.1']
    #allocation7 [shape = 'u8[65536]{0}', space=vmem, size = 0x10000, scoped, tag = 'input window, operand 2, single buffered']
    #allocation8 [shape = 'u8[4096]{0}', space=vmem, size = 0x1000, scoped, tag = 'output window, operand 0, single buffered']
    %11 = vsyncpa [#allocation3], 0
    %12 = vsyncpa [#allocation6], 0
    %13 = vsyncpa [#allocation4], 0
    // Predicated region
    $region2: #{tpu_custom_call.1} parent=1 // pred_check
      _
    $region3: #{tpu_custom_call.1} parent=1 // pred_check_branch
      %15 = sbr.rel (0) target = $region5
    $region4: #{tpu_custom_call.1} parent=1 // pred_region
      %s17 = ssub.s32 128, 128
      %18 = vsyncadd [#allocation3], %s17
      %s20 = sshll.u32 [#allocation2], 4
      %s21 = int_to_ptr.vmem [resolvable:$true] %s20
      %23 = dma.hbm_to_vmem [thread:$0]  %s0, 128, %s21, [#allocation3]
    $region5: #{tpu_custom_call.1} parent=1 // pred_fallthru
      _
    // Predicated region
    $region6: #{tpu_custom_call.1} parent=1 // pred_check
      _
    $region7: #{tpu_custom_call.1} parent=1 // pred_check_branch
      %25 = sbr.rel (0) target = $region9
    $region8: #{tpu_custom_call.1} parent=1 // pred_region
      %s27 = ssub.s32 2048, 2048
      %28 = vsyncadd [#allocation6], %s27
      %s29 = sshll.u32 [#allocation5], 4
      %s30 = int_to_ptr.vmem [resolvable:$true] %s29
      %35 = dma.hbm_to_vmem [thread:$0]  %s1, 2048, %s30, [#allocation6], 128, 128, 8
    $region9: #{tpu_custom_call.1} parent=1 // pred_fallthru
      _
    // Predicated region
    $region10: #{tpu_custom_call.1} parent=1 // pred_check
      _
    $region11: #{tpu_custom_call.1} parent=1 // pred_check_branch
      %37 = sbr.rel (0) target = $region13
    $region12: #{tpu_custom_call.1} parent=1 // pred_region
      %s39 = ssub.s32 2048, 2048
      %40 = vsyncadd [#allocation6], %s39
      %s41 = sshll.u32 [#allocation7], 4
      %s42 = int_to_ptr.vmem [resolvable:$true] %s41
      %47 = dma.hbm_to_vmem [thread:$0]  %s2, 2048, %s42, [#allocation6], 128, 128, 8
    $region13: #{tpu_custom_call.1} parent=1 // pred_fallthru
      _
    // Predicated region
    $region14: #{tpu_custom_call.1} parent=1 // pred_check
      _
    $region15: #{tpu_custom_call.1} parent=1 // pred_check_branch
      %49 = sbr.rel (0) target = $region17
    $region16: #{tpu_custom_call.1} parent=1 // pred_region
      _
    $region17: #{tpu_custom_call.1} parent=1 // pred_fallthru
      _
    // Predicated region
    $region18: #{tpu_custom_call.1} parent=1 // pred_check
      _
    $region19: #{tpu_custom_call.1} parent=1 // pred_check_branch
      %51 = sbr.rel (0) target = $region21
    $region20: #{tpu_custom_call.1} parent=1 // pred_region
      _
    $region21: #{tpu_custom_call.1} parent=1 // pred_fallthru
      _
    // Predicated region
    $region22: #{tpu_custom_call.1} parent=1 // pred_check
      _
    $region23: #{tpu_custom_call.1} parent=1 // pred_check_branch
      %53 = sbr.rel (0) target = $region25
    $region24: #{tpu_custom_call.1} parent=1 // pred_region
      _
    $region25: #{tpu_custom_call.1} parent=1 // pred_fallthru
      _
    // Predicated region
    $region26: #{tpu_custom_call.1} parent=1 // pred_check
      _
    $region27: #{tpu_custom_call.1} parent=1 // pred_check_branch
      %55 = sbr.rel (0) target = $region29
    $region28: #{tpu_custom_call.1} parent=1 // pred_region
      %56 = dma.done [#allocation3], 128
    $region29: #{tpu_custom_call.1} parent=1 // pred_fallthru
      _
    // Predicated region
    $region30: #{tpu_custom_call.1} parent=1 // pred_check
      _
    $region31: #{tpu_custom_call.1} parent=1 // pred_check_branch
      %58 = sbr.rel (0) target = $region33
    $region32: #{tpu_custom_call.1} parent=1 // pred_region
      %59 = dma.done [#allocation6], 2048
    $region33: #{tpu_custom_call.1} parent=1 // pred_fallthru
      _
    // Predicated region
    $region34: #{tpu_custom_call.1} parent=1 // pred_check
      _
    $region35: #{tpu_custom_call.1} parent=1 // pred_check_branch
      %61 = sbr.rel (0) target = $region37
    $region36: #{tpu_custom_call.1} parent=1 // pred_region
      %62 = dma.done [#allocation6], 2048
    $region37: #{tpu_custom_call.1} parent=1 // pred_fallthru
      _
    %p63 = scmp.eq.s32.totalorder 0, 0
    // Predicated region
    $region38: #{tpu_custom_call.1} parent=1 // pred_check
      %p64 = pneg %p63
    $region39: #{tpu_custom_call.1} parent=1 // pred_check_branch
      %66 = sbr.rel (%p64) target = $region41
    $region40: #{tpu_custom_call.1} parent=1 // pred_region
      %v67 = vld [vmem:[%s5] sm:$0x1]
      %v69 = vlaneseq
      %v70 = vshrl.u32 %v69, 7
      %v71 = vsub.s32 0, %v70
      %v72 = vrot.slane %v67, %v71
      %74 = vst [vmem:[#allocation8] sm:$0xff] %v72
    $region41: #{tpu_custom_call.1} parent=1 // pred_fallthru
      _
    %v75 = vld [vmem:[#allocation2] sm:$0xff]
    %v76 = vld [vmem:[%s3] sm:$0x1]
    %v78 = vlaneseq
    %v79 = vshrl.u32 %v78, 7
    %v80 = vsub.s32 0, %v79
    %v81 = vrot.slane %v76, %v80
    %v83 = vmul.f32 %v75, %v81
    %v84 = vld [vmem:[#allocation5] sm:$0xff]
    %v85 = vld [vmem:[#allocation5 + $0x8] sm:$0xff]
    %v86 = vld [vmem:[#allocation5 + $0x10] sm:$0xff]
    %v87 = vld [vmem:[#allocation5 + $0x18] sm:$0xff]
    %v88 = vld [vmem:[#allocation5 + $0x20] sm:$0xff]
    %v89 = vld [vmem:[#allocation5 + $0x28] sm:$0xff]
    %v90 = vld [vmem:[#allocation5 + $0x30] sm:$0xff]
    %v91 = vld [vmem:[#allocation5 + $0x38] sm:$0xff]
    %v92 = vld [vmem:[#allocation5 + $0x40] sm:$0xff]
    %v93 = vld [vmem:[#allocation5 + $0x48] sm:$0xff]
    %v94 = vld [vmem:[#allocation5 + $0x50] sm:$0xff]
    %v95 = vld [vmem:[#allocation5 + $0x58] sm:$0xff]
    %v96 = vld [vmem:[#allocation5 + $0x60] sm:$0xff]
    %v97 = vld [vmem:[#allocation5 + $0x68] sm:$0xff]
    %v98 = vld [vmem:[#allocation5 + $0x70] sm:$0xff]
    %v99 = vld [vmem:[#allocation5 + $0x78] sm:$0xff]
    %v100 = vld [vmem:[#allocation7] sm:$0xff]
    %v101 = vld [vmem:[#allocation7 + $0x8] sm:$0xff]
    %v102 = vld [vmem:[#allocation7 + $0x10] sm:$0xff]
    %v103 = vld [vmem:[#allocation7 + $0x18] sm:$0xff]
    %v104 = vld [vmem:[#allocation7 + $0x20] sm:$0xff]
    %v105 = vld [vmem:[#allocation7 + $0x28] sm:$0xff]
    %v106 = vld [vmem:[#allocation7 + $0x30] sm:$0xff]
    %v107 = vld [vmem:[#allocation7 + $0x38] sm:$0xff]
    %v108 = vld [vmem:[#allocation7 + $0x40] sm:$0xff]
    %v109 = vld [vmem:[#allocation7 + $0x48] sm:$0xff]
    %v110 = vld [vmem:[#allocation7 + $0x50] sm:$0xff]
    %v111 = vld [vmem:[#allocation7 + $0x58] sm:$0xff]
    %v112 = vld [vmem:[#allocation7 + $0x60] sm:$0xff]
    %v113 = vld [vmem:[#allocation7 + $0x68] sm:$0xff]
    %v114 = vld [vmem:[#allocation7 + $0x70] sm:$0xff]
    %v115 = vld [vmem:[#allocation7 + $0x78] sm:$0xff]
    %116 = vmatprep.subr.mxu0 0.0
    %117 = vmatpush1.msra.mxu0 %v115
    %118 = vmatprep.subr.mxu0 0.0
    %119 = vmatpush1.msra.mxu0 %v114
    %120 = vmatprep.subr.mxu0 0.0
    %121 = vmatpush1.msra.mxu0 %v113
    %122 = vmatprep.subr.mxu0 0.0
    %123 = vmatpush1.msra.mxu0 %v112
    %124 = vmatprep.subr.mxu0 0.0
    %125 = vmatpush1.msra.mxu0 %v111
    %126 = vmatprep.subr.mxu0 0.0
    %127 = vmatpush1.msra.mxu0 %v110
    %128 = vmatprep.subr.mxu0 0.0
    %129 = vmatpush1.msra.mxu0 %v109
    %130 = vmatprep.subr.mxu0 0.0
    %131 = vmatpush1.msra.mxu0 %v108
    %132 = vmatprep.subr.mxu0 0.0
    %133 = vmatpush1.msra.mxu0 %v107
    %134 = vmatprep.subr.mxu0 0.0
    %135 = vmatpush1.msra.mxu0 %v106
    %136 = vmatprep.subr.mxu0 0.0
    %137 = vmatpush1.msra.mxu0 %v105
    %138 = vmatprep.subr.mxu0 0.0
    %139 = vmatpush1.msra.mxu0 %v104
    %140 = vmatprep.subr.mxu0 0.0
    %141 = vmatpush1.msra.mxu0 %v103
    %142 = vmatprep.subr.mxu0 0.0
    %143 = vmatpush1.msra.mxu0 %v102
    %144 = vmatprep.subr.mxu0 0.0
    %145 = vmatpush1.msra.mxu0 %v101
    %146 = vmatprep.subr.mxu0 0.0
    %147 = vmatpush1.msra.mxu0 %v100
    %148 = vmatprep.subr.mxu0 0.0
    %149 = vmatpush2.msra.mxu0 0.0
    %150 = vmatprep.subr.mxu0 0.0
    %151 = vmatpush2.msra.mxu0 0.0
    %152 = vmatprep.subr.mxu0 0.0
    %153 = vmatpush2.msra.mxu0 0.0
    %154 = vmatprep.subr.mxu0 0.0
    %155 = vmatpush2.msra.mxu0 0.0
    %156 = vmatprep.subr.mxu0 0.0
    %157 = vmatpush2.msra.mxu0 0.0
    %158 = vmatprep.subr.mxu0 0.0
    %159 = vmatpush2.msra.mxu0 0.0
    %160 = vmatprep.subr.mxu0 0.0
    %161 = vmatpush2.msra.mxu0 0.0
    %162 = vmatprep.subr.mxu0 0.0
    %163 = vmatpush2.msra.mxu0 0.0
    %164 = vmatprep.subr.mxu0 0.0
    %165 = vmatpush2.msra.mxu0 0.0
    %166 = vmatprep.subr.mxu0 0.0
    %167 = vmatpush2.msra.mxu0 0.0
    %168 = vmatprep.subr.mxu0 0.0
    %169 = vmatpush2.msra.mxu0 0.0
    %170 = vmatprep.subr.mxu0 0.0
    %171 = vmatpush2.msra.mxu0 0.0
    %172 = vmatprep.subr.mxu0 0.0
    %173 = vmatpush2.msra.mxu0 0.0
    %174 = vmatprep.subr.mxu0 0.0
    %175 = vmatpush2.msra.mxu0 0.0
    %176 = vmatprep.subr.mxu0 0.0
    %177 = vmatpush2.msra.mxu0 0.0
    %178 = vmatprep.subr.mxu0 0.0
    %179 = vmatpush2.msra.mxu0 0.0
    %180 = vmatprep.mubr.f32.mxu0 0.0
    %181 = vmatmul.mubr.f32.gmra.mxu0 %v83
    %v182 = vpop.f32.mrf.mxu0
    %v183 = vadd.f32 0.0, %v182
    %v184 = vpop.f32.mrf.mxu0
    %185 = vdwg.mxu0
    %v186 = vld [vmem:[#allocation8] sm:$0xff]
    %v187 = vld [vmem:[%s4] sm:$0x1]
    %v189 = vlaneseq
    %v190 = vshrl.u32 %v189, 7
    %v191 = vsub.s32 0, %v190
    %v192 = vrot.slane %v187, %v191
    %v194 = vmul.f32 %v183, %v192
    %195 = vmatprep.subr.mxu0 0.0
    %196 = vmatpush1.msra.mxu0 %v99
    %197 = vmatprep.subr.mxu0 0.0
    %198 = vmatpush1.msra.mxu0 %v98
    %199 = vmatprep.subr.mxu0 0.0
    %200 = vmatpush1.msra.mxu0 %v97
    %201 = vmatprep.subr.mxu0 0.0
    %202 = vmatpush1.msra.mxu0 %v96
    %203 = vmatprep.subr.mxu0 0.0
    %204 = vmatpush1.msra.mxu0 %v95
    %205 = vmatprep.subr.mxu0 0.0
    %206 = vmatpush1.msra.mxu0 %v94
    %207 = vmatprep.subr.mxu0 0.0
    %208 = vmatpush1.msra.mxu0 %v93
    %209 = vmatprep.subr.mxu0 0.0
    %210 = vmatpush1.msra.mxu0 %v92
    %211 = vmatprep.subr.mxu0 0.0
    %212 = vmatpush1.msra.mxu0 %v91
    %213 = vmatprep.subr.mxu0 0.0
    %214 = vmatpush1.msra.mxu0 %v90
    %215 = vmatprep.subr.mxu0 0.0
    %216 = vmatpush1.msra.mxu0 %v89
    %217 = vmatprep.subr.mxu0 0.0
    %218 = vmatpush1.msra.mxu0 %v88
    %219 = vmatprep.subr.mxu0 0.0
    %220 = vmatpush1.msra.mxu0 %v87
    %221 = vmatprep.subr.mxu0 0.0
    %222 = vmatpush1.msra.mxu0 %v86
    %223 = vmatprep.subr.mxu0 0.0
    %224 = vmatpush1.msra.mxu0 %v85
    %225 = vmatprep.subr.mxu0 0.0
    %226 = vmatpush1.msra.mxu0 %v84
    %227 = vmatprep.subr.mxu0 0.0
    %228 = vmatpush2.msra.mxu0 0.0
    %229 = vmatprep.subr.mxu0 0.0
    %230 = vmatpush2.msra.mxu0 0.0
    %231 = vmatprep.subr.mxu0 0.0
    %232 = vmatpush2.msra.mxu0 0.0
    %233 = vmatprep.subr.mxu0 0.0
    %234 = vmatpush2.msra.mxu0 0.0
    %235 = vmatprep.subr.mxu0 0.0
    %236 = vmatpush2.msra.mxu0 0.0
    %237 = vmatprep.subr.mxu0 0.0
    %238 = vmatpush2.msra.mxu0 0.0
    %239 = vmatprep.subr.mxu0 0.0
    %240 = vmatpush2.msra.mxu0 0.0
    %241 = vmatprep.subr.mxu0 0.0
    %242 = vmatpush2.msra.mxu0 0.0
    %243 = vmatprep.subr.mxu0 0.0
    %244 = vmatpush2.msra.mxu0 0.0
    %245 = vmatprep.subr.mxu0 0.0
    %246 = vmatpush2.msra.mxu0 0.0
    %247 = vmatprep.subr.mxu0 0.0
    %248 = vmatpush2.msra.mxu0 0.0
    %249 = vmatprep.subr.mxu0 0.0
    %250 = vmatpush2.msra.mxu0 0.0
    %251 = vmatprep.subr.mxu0 0.0
    %252 = vmatpush2.msra.mxu0 0.0
    %253 = vmatprep.subr.mxu0 0.0
    %254 = vmatpush2.msra.mxu0 0.0
    %255 = vmatprep.subr.mxu0 0.0
    %256 = vmatpush2.msra.mxu0 0.0
    %257 = vmatprep.subr.mxu0 0.0
    %258 = vmatpush2.msra.mxu0 0.0
    %259 = vmatprep.mubr.f32.mxu0 0.0
    %260 = vmatmul.mubr.f32.gmra.mxu0 %v75
    %v261 = vpop.f32.mrf.mxu0
    %v262 = vadd.f32 %v194, %v261
    %v263 = vpop.f32.mrf.mxu0
    %264 = vdwg.mxu0
    %v265 = vadd.f32 %v186, %v262
    %266 = vst [vmem:[#allocation8] sm:$0xff] %v265
    // Predicated region
    $region42: #{tpu_custom_call.1} parent=1 // pred_check
      _
    $region43: #{tpu_custom_call.1} parent=1 // pred_check_branch
      %268 = sbr.rel (0) target = $region45
    $region44: #{tpu_custom_call.1} parent=1 // pred_region
      %s270 = ssub.s32 128, 128
      %271 = vsyncadd [#allocation4], %s270
      %s273 = sshll.u32 [#allocation8], 4
      %s274 = int_to_ptr.vmem [resolvable:$true] %s273
      %276 = dma.vmem_to_hbm [thread:$0]  %s274, 128, %s6, [#allocation4]
    $region45: #{tpu_custom_call.1} parent=1 // pred_fallthru
      _
    // Predicated region
    $region46: #{tpu_custom_call.1} parent=1 // pred_check
      _
    $region47: #{tpu_custom_call.1} parent=1 // pred_check_branch
      %278 = sbr.rel (0) target = $region49
    $region48: #{tpu_custom_call.1} parent=1 // pred_region
      %279 = dma.done [#allocation4], 128
    $region49: #{tpu_custom_call.1} parent=1 // pred_fallthru
      _
    %280 = vsyncpa [#allocation3], 1
    %281 = vsyncpa [#allocation6], 1
    %282 = vsyncpa [#allocation4], 1

</llo_original>
